<compile_context>
chip_gen: v7x
topology: tpu7x:2x2x1
jax: 0.10.0
libtpu: 0.0.40
codegen_flags: <defaults>
</compile_context>

<pallas_src>
import jax
import jax.numpy as jnp
from jax.experimental import pallas as pl
from jax.experimental.pallas import tpu as pltpu

_LANE = 128      # lane width (last dim)
_SUBLANE = 8     # sublane width (second-to-last dim)


def _vmem_plan():
    """(per-x-tile byte budget, vmem_limit_bytes) for the current TPU generation."""
    try:
        cap = pltpu.get_tpu_info().vmem_capacity_bytes
    except Exception:
        cap = 64 * 1024 * 1024            # conservative fallback: v7x per-TC VMEM
    if cap >= 100 * 1024 * 1024:          # v5e / v6e: 128 MiB physical VMEM
        return 16 * 1024 * 1024, 100 * 1024 * 1024
    # v7x: 64 MiB per TensorCore.  Budget leaves room for 2x double-buffered x
    # plus worst-case f32 cast/product intermediates of the (tb, ts, th) tile.
    return 8 * 1024 * 1024, 56 * 1024 * 1024


def _select_tiles(B, S, H, itemsize, budget):
    """Pick (tb, ts, th) honoring the (8, 128) block rules and the VMEM budget."""
    # Batch tile: out's second-to-last dim -> multiple of 8, or full B.
    tb = B if B <= _SUBLANE else _SUBLANE

    # Hidden tile: lane dim -> multiple of 128, or full H.  Prefer full H;
    # shrink in 128-lane steps only if even a minimal S chunk would not fit.
    th = H
    if H % _LANE == 0:
        min_ts = min(S, _SUBLANE)
        while th > _LANE and tb * min_ts * th * itemsize > budget:
            th = max(_LANE, ((th // 2) // _LANE) * _LANE)
    # else: full-extent H block is the only legal choice (documented edge case).

    # Sequence tile: x/w second-to-last dim -> multiple of 8, or full S.
    tok_cap = max(1, budget // max(1, tb * th * itemsize))
    if S <= tok_cap or S <= _SUBLANE:
        ts = S
    else:
        ts = max(_SUBLANE, (tok_cap // _SUBLANE) * _SUBLANE)

    # With full S and full H resident, spend leftover budget on more rows/step.
    if ts == S and th == H and B > tb:
        rows_cap = max(1, budget // max(1, S * th * itemsize))
        if rows_cap >= B:
            tb = B
        elif rows_cap > tb:
            tb = max(_SUBLANE, (rows_cap // _SUBLANE) * _SUBLANE)

    # Keep both v7x TensorCores busy: the "parallel" (B, H) axes should have
    # >= 2 total grid steps when legally possible (harmless on v5e/v6e).
    if pl.cdiv(B, tb) * pl.cdiv(H, th) < 2:
        if th % (2 * _LANE) == 0:
            th //= 2
        elif tb > _SUBLANE and tb % (2 * _SUBLANE) == 0:
            tb //= 2
    return tb, ts, th


def mean_pooler(x, mask, sentence_lengths, indxs):
    """x: [B, S, H]; mask: [N, S] (0/1); sentence_lengths: [N]; indxs: [B] int."""
    B, S, H = x.shape
    itemsize = x.dtype.itemsize

    # Glue (tiny next to x): gather per-example mask / length and fold 1/length
    # into one f32 weight per (row, token).  Same result as sum-then-divide up
    # to one extra f32 rounding per term.  lens == 0 -> NaN, like the reference.
    w = jnp.take(mask, indxs, axis=0).astype(jnp.float32)                  # [B, S]
    lens = jnp.take(sentence_lengths, indxs, axis=0).astype(jnp.float32)   # [B]
    w = (w / lens[:, None])[:, :, None]                                    # [B, S, 1]

    budget, vmem_limit = _vmem_plan()
    tb, ts, th = _select_tiles(B, S, H, itemsize, budget)
    grid = (pl.cdiv(B, tb), pl.cdiv(H, th), pl.cdiv(S, ts))
    need_mask = (S % ts) != 0   # partial trailing S block -> zero its weights

    def kernel(x_ref, w_ref, o_ref, acc_ref):
        # x_ref: (tb, ts, th)   w_ref: (tb, ts, 1) f32   o_ref: (tb, th)
        # acc_ref: (tb, th) f32 scratch, resident across the S grid axis.
        s_idx = pl.program_id(2)

        @pl.when(s_idx == 0)
        def _init():
            acc_ref[...] = jnp.zeros_like(acc_ref)

        xb = x_ref[...].astype(jnp.float32)
        wb = w_ref[...]                       # sublane-aligned with xb's S axis
        if need_mask:
            tok = s_idx * ts + jax.lax.broadcasted_iota(jnp.int32, wb.shape, 1)
            wb = jnp.where(tok < S, wb, 0.0)
        acc_ref[...] += jnp.sum(xb * wb, axis=1)   # f32 accumulate over sequence

        @pl.when(s_idx == pl.num_programs(2) - 1)
        def _finalize():
            o_ref[...] = acc_ref[...].astype(o_ref.dtype)

    return pl.pallas_call(
        kernel,
        out_shape=jax.ShapeDtypeStruct((B, H), x.dtype),
        grid_spec=pltpu.PrefetchScalarGridSpec(
            num_scalar_prefetch=0,
            grid=grid,
            in_specs=[
                pl.BlockSpec((tb, ts, th), lambda b, h, s: (b, s, h)),
                pl.BlockSpec((tb, ts, 1), lambda b, h, s: (b, s, 0)),
            ],
            out_specs=pl.BlockSpec((tb, th), lambda b, h, s: (b, h)),
            scratch_shapes=[pltpu.VMEM((tb, th), jnp.float32)],
        ),
        compiler_params=pltpu.CompilerParams(
            dimension_semantics=("parallel", "parallel", "arbitrary"),
            vmem_limit_bytes=vmem_limit,
        ),
        cost_estimate=pl.CostEstimate(
            flops=2 * B * S * H,
            transcendentals=0,
            bytes_accessed=B * S * H * itemsize + B * S * 4 + B * H * itemsize,
        ),
    )(x, w)


if __name__ == "__main__":
    key = jax.random.PRNGKey(0)
    B, S, H = 2, 8, 32     # batch, seq, hidden
    N = 6                  # number of sentences held by the "tokenizer"

    x = jax.random.normal(key, (B, S, H), dtype=jnp.float32)

    # Deterministic synthetic tokenizer state: per-sentence lengths and 0/1 masks.
    sentence_lengths = (jnp.arange(N, dtype=jnp.int32) % S) + 1          # [N] in [1, S]
    token_pos = jnp.arange(S, dtype=jnp.int32)[None, :]                  # [1, S]
    mask = (token_pos < sentence_lengths[:, None]).astype(jnp.float32)   # [N, S]
    indxs = jnp.array([1, 4], dtype=jnp.int32)                           # [B]

    out = mean_pooler(x, mask, sentence_lengths, indxs)
    jax.block_until_ready(out)

    # Reference check (plain JAX, same formula as the PyTorch module).
    m = mask[indxs]                                                      # [B, S]
    l = sentence_lengths[indxs].astype(jnp.float32)                      # [B]
    ref = jnp.sum(x * m[:, :, None], axis=1) / l[:, None]
    assert out.shape == (B, H)
    assert jnp.allclose(out, ref, atol=1e-5, rtol=1e-5)

    print("KERNEL_OK")
</pallas_src>

<mosaic_0001>
module attributes {stable_mosaic.version = 11 : i64} {
  func.func @kernel(%arg0: i32, %arg1: i32, %arg2: i32, %arg3: memref<2x8x32xf32, #tpu.memory_space<vmem>>, %arg4: memref<2x8x1xf32, #tpu.memory_space<vmem>>, %arg5: memref<2x32xf32, #tpu.memory_space<vmem>>, %arg6: memref<2x32xf32, #tpu.memory_space<vmem>>) attributes {dimension_semantics = [#tpu.dimension_semantics<parallel>, #tpu.dimension_semantics<parallel>, #tpu.dimension_semantics<arbitrary>], iteration_bounds = array<i64: 1, 1, 1>, scalar_prefetch = 0 : i64, scratch_operands = 1 : i64, tpu.core_type = #tpu.core_type<tc>, window_params = [{transform_indices = @transform_0, window_bounds = array<i64: 2, 8, 32>}, {transform_indices = @transform_1, window_bounds = array<i64: 2, 8, 1>}, {transform_indices = @transform_2, window_bounds = array<i64: 2, 32>}]} {
    %c0_i32 = arith.constant 0 : i32
    %0 = arith.cmpi eq, %arg2, %c0_i32 : i32
    %1 = arith.extui %0 : i1 to i32
    %c0_i32_0 = arith.constant 0 : i32
    %2 = arith.cmpi ne, %1, %c0_i32_0 : i32
    scf.if %2 {
      %cst_12 = arith.constant 0.000000e+00 : f32
      %14 = vector.broadcast %cst_12 : f32 to vector<2x32xf32>
      %c0_13 = arith.constant 0 : index
      %c0_14 = arith.constant 0 : index
      %15 = vector.load %arg6[%c0_13, %c0_14] : memref<2x32xf32, #tpu.memory_space<vmem>>, vector<2x32xf32>
      tpu.vector_store %arg6[%c0_13, %c0_14], %14 {strides = array<i32>} : memref<2x32xf32, #tpu.memory_space<vmem>>, vector<2x32xf32>,
    } else {
    }
    %c0 = arith.constant 0 : index
    %c0_1 = arith.constant 0 : index
    %c0_2 = arith.constant 0 : index
    %3 = vector.load %arg3[%c0, %c0_1, %c0_2] : memref<2x8x32xf32, #tpu.memory_space<vmem>>, vector<2x8x32xf32>
    %c0_3 = arith.constant 0 : index
    %c0_4 = arith.constant 0 : index
    %c0_5 = arith.constant 0 : index
    %4 = vector.load %arg4[%c0_3, %c0_4, %c0_5] : memref<2x8x1xf32, #tpu.memory_space<vmem>>, vector<2x8x1xf32>
    %c0_6 = arith.constant 0 : index
    %c0_7 = arith.constant 0 : index
    %5 = vector.load %arg6[%c0_6, %c0_7] : memref<2x32xf32, #tpu.memory_space<vmem>>, vector<2x32xf32>
    %6 = vector.broadcast %4 : vector<2x8x1xf32> to vector<2x8x32xf32>
    %7 = arith.mulf %3, %6 : vector<2x8x32xf32>
    %cst = arith.constant dense<0.000000e+00> : vector<2x32xf32>
    %8 = vector.multi_reduction <add>, %7, %cst [1] : vector<2x8x32xf32> to vector<2x32xf32>
    %9 = arith.addf %5, %8 : vector<2x32xf32>
    %c0_8 = arith.constant 0 : index
    %c0_9 = arith.constant 0 : index
    %10 = vector.load %arg6[%c0_8, %c0_9] : memref<2x32xf32, #tpu.memory_space<vmem>>, vector<2x32xf32>
    tpu.vector_store %arg6[%c0_8, %c0_9], %9 {strides = array<i32>} : memref<2x32xf32, #tpu.memory_space<vmem>>, vector<2x32xf32>,
    %c0_i32_10 = arith.constant 0 : i32
    %11 = arith.cmpi eq, %arg2, %c0_i32_10 : i32
    %12 = arith.extui %11 : i1 to i32
    %c0_i32_11 = arith.constant 0 : i32
    %13 = arith.cmpi ne, %12, %c0_i32_11 : i32
    scf.if %13 {
      %c0_12 = arith.constant 0 : index
      %c0_13 = arith.constant 0 : index
      %14 = vector.load %arg6[%c0_12, %c0_13] : memref<2x32xf32, #tpu.memory_space<vmem>>, vector<2x32xf32>
      %c0_14 = arith.constant 0 : index
      %c0_15 = arith.constant 0 : index
      %15 = vector.load %arg5[%c0_14, %c0_15] : memref<2x32xf32, #tpu.memory_space<vmem>>, vector<2x32xf32>
      tpu.vector_store %arg5[%c0_14, %c0_15], %14 {strides = array<i32>} : memref<2x32xf32, #tpu.memory_space<vmem>>, vector<2x32xf32>,
    } else {
    }
    return
  }
  func.func @transform_0(%arg0: i32, %arg1: i32, %arg2: i32) -> (i32, i32, i32) {
    %c0_i32 = arith.constant 0 : i32
    return %arg0, %arg2, %arg1 : i32, i32, i32
  }
  func.func @transform_1(%arg0: i32, %arg1: i32, %arg2: i32) -> (i32, i32, i32) {
    %c0_i32 = arith.constant 0 : i32
    %c0_i32_0 = arith.constant 0 : i32
    return %arg0, %arg2, %c0_i32 : i32, i32, i32
  }
  func.func @transform_2(%arg0: i32, %arg1: i32, %arg2: i32) -> (i32, i32) {
    %c0_i32 = arith.constant 0 : i32
    return %arg0, %arg1 : i32, i32
  }
}

</mosaic_0001>

<llo_original>
// kernel: tpu_custom_call.1
$region0: #{tpu_custom_call.1}
  #allocation0 [shape = 'u32[]', space=smem, size = 0x4, offset = 0x4, fixed_abs, tag = 'smem constant byte address 0x4 - core index']
  #allocation1 [shape = 'u32[144,128]{1,0:T(1,128)}', space=vmem, size = 0x12000, scoped, tag = 'internal scratch']
  #allocation2 [shape = 'f32[2,32]{1,0:T(2,128)}', space=vmem, size = 0x400, scoped, tag = 'scratch operand']
  %s0 = inlined_call_operand.vmem [shape: f32[2,8,32], index: 0, kind: input, shape index: {}]
  %s1 = inlined_call_operand.vmem [shape: f32[2,8,1], index: 1, kind: input, shape index: {}]
  %s2 = inlined_call_operand.hbm [shape: f32[2,32], index: 2, kind: output, shape index: {}]
  %s3 = sld [smem:[#allocation0]]
  $region26: #{tpu_custom_call.1} parent=0
    _
  %s5 = ssub.s32 1, %s3
  %s6 = scalar_select 0, %s5, %s3
  $region1: #{tpu_custom_call.1} parent=0
    #allocation3 [shape = 'u8[1024]{0}', space=vmem, size = 0x400, scoped, tag = 'output window, operand 0, single buffered']
    #allocation4 [shape = 's32[1]{0}', space=sflag, size = 0x4, scoped, tag = 'scoped memory for tpu_custom_call.1']
    %7 = vsyncpa [#allocation4], 0
    // Predicated region
    $region2: #{tpu_custom_call.1} parent=1 // pred_check
      _
    $region3: #{tpu_custom_call.1} parent=1 // pred_check_branch
      %9 = sbr.rel (0) target = $region5
    $region4: #{tpu_custom_call.1} parent=1 // pred_region
      _
    $region5: #{tpu_custom_call.1} parent=1 // pred_fallthru
      _
    // Predicated region
    $region6: #{tpu_custom_call.1} parent=1 // pred_check
      _
    $region7: #{tpu_custom_call.1} parent=1 // pred_check_branch
      %11 = sbr.rel (0) target = $region9
    $region8: #{tpu_custom_call.1} parent=1 // pred_region
      _
    $region9: #{tpu_custom_call.1} parent=1 // pred_fallthru
      _
    %p12 = scmp.eq.s32.totalorder 0, 0
    // Predicated region
    $region10: #{tpu_custom_call.1} parent=1 // pred_check
      %p13 = pneg %p12
    $region11: #{tpu_custom_call.1} parent=1 // pred_check_branch
      %15 = sbr.rel (%p13) target = $region13
    $region12: #{tpu_custom_call.1} parent=1 // pred_region
      %vm16 = vcmask 254976
      %17 = vst.msk [vmem:[#allocation2] sm:$0x3] %vm16, 0.0
    $region13: #{tpu_custom_call.1} parent=1 // pred_fallthru
      _
    %v18 = vld [vmem:[%s0] sm:$0xff]
    %v19 = vld [vmem:[%s0 + $0x8] sm:$0xff]
    %v20 = vld [vmem:[%s1] sm:$0xff]
    %v21 = vld [vmem:[%s1 + $0x8] sm:$0xff]
    %v22 = vld [vmem:[#allocation2] sm:$0x3]
    %24 = vset.pattern.permute.xlu0 0
    %25 = vperm.xlu0 %24, %v20
    %v26 = vpop.permute.xlu0 %25
    %29 = vset.pattern.permute.xlu0 0
    %30 = vperm.xlu0 %29, %v21
    %v31 = vpop.permute.xlu0 %30
    %v33 = vmul.f32 %v18, %v26
    %v34 = vmul.f32 %v19, %v31
    %vm35 = vcmask 261120
    %v36 = vsel %vm35, %v33, 0.0
    %v37 = vrot.slane %v36, 4
    %v38 = vadd.f32 %v36, %v37
    %v39 = vrot.slane %v38, 2
    %v40 = vadd.f32 %v38, %v39
    %v41 = vrot.slane %v40, 1
    %v42 = vadd.f32 %v40, %v41
    %v43 = vsel %vm35, %v34, 0.0
    %v44 = vrot.slane %v43, 4
    %v45 = vadd.f32 %v43, %v44
    %v46 = vrot.slane %v45, 2
    %v47 = vadd.f32 %v45, %v46
    %v48 = vrot.slane %v47, 1
    %v49 = vadd.f32 %v47, %v48
    %vm52 = vcmask 1041409
    %v53 = vsel %vm52, %v49, %v42
    %v55 = vadd.f32 %v22, %v53
    %vm56 = vcmask 254976
    %57 = vst.msk [vmem:[#allocation2] sm:$0x3] %vm56, %v55
    // Predicated region
    $region14: #{tpu_custom_call.1} parent=1 // pred_check
      %p58 = pneg %p12
    $region15: #{tpu_custom_call.1} parent=1 // pred_check_branch
      %60 = sbr.rel (%p58) target = $region17
    $region16: #{tpu_custom_call.1} parent=1 // pred_region
      %v61 = vld [vmem:[#allocation2] sm:$0x3]
      %62 = vst.msk [vmem:[#allocation3] sm:$0x3] %vm56, %v61
    $region17: #{tpu_custom_call.1} parent=1 // pred_fallthru
      _
    // Predicated region
    $region18: #{tpu_custom_call.1} parent=1 // pred_check
      _
    $region19: #{tpu_custom_call.1} parent=1 // pred_check_branch
      %64 = sbr.rel (0) target = $region21
    $region20: #{tpu_custom_call.1} parent=1 // pred_region
      %s66 = ssub.s32 32, 32
      %67 = vsyncadd [#allocation4], %s66
      %s69 = sshll.u32 [#allocation3], 4
      %s70 = int_to_ptr.vmem [resolvable:$true] %s69
      %72 = dma.vmem_to_hbm [thread:$0]  %s70, 32, %s2, [#allocation4]
    $region21: #{tpu_custom_call.1} parent=1 // pred_fallthru
      _
    // Predicated region
    $region22: #{tpu_custom_call.1} parent=1 // pred_check
      _
    $region23: #{tpu_custom_call.1} parent=1 // pred_check_branch
      %74 = sbr.rel (0) target = $region25
    $region24: #{tpu_custom_call.1} parent=1 // pred_region
      %75 = dma.done [#allocation4], 32
    $region25: #{tpu_custom_call.1} parent=1 // pred_fallthru
      _
    %76 = vsyncpa [#allocation4], 1

</llo_original>
